<compile_context>
chip_gen: v7x
topology: tpu7x:2x2x1
jax: 0.10.0
libtpu: 0.0.40
codegen_flags: <defaults>
</compile_context>

<pallas_src>
import math

import jax
import jax.numpy as jnp
from jax.experimental import pallas as pl
from jax.experimental.pallas import tpu as pltpu


# ----------------------------- helpers --------------------------------------


def _round_up(n, m):
    return ((n + m - 1) // m) * m


def _pad2d(a, rows, cols):
    r, c = a.shape
    return jnp.pad(a, ((0, rows - r), (0, cols - c)))


def _choose_batch_tile(batch, ip, hp, x_bytes, budget_bytes=40 * 1024 * 1024):
    """Pick a batch tile (multiple of 8) so resident weights + double-buffered
    activation tiles stay under the VMEM budget (safe for v7x's 64 MiB)."""
    # bf16/f32 weights resident across the grid (count x2 for buffering slack).
    weight_bytes = 2 * ((ip * hp + hp * 2 * hp + 2 * hp * hp) * x_bytes + 4 * hp * 4)
    per_row = ip * x_bytes + 3 * hp * 4 + 3 * hp * 4  # x tile + state ins + outs
    tb = min(512, _round_up(batch, 8))
    while tb > 8 and weight_bytes + 2 * tb * per_row > budget_bytes:
        tb //= 2
    return max(_round_up(tb, 8), 8)


# ----------------------------- kernel ----------------------------------------


def snn_dense_cell_kernel(
    x_ref, mem_ref, spk_ref, b_ref,            # activation tiles
    wx_ref, bx_ref,                            # layer1_x (pre-transposed, padded)
    wdx_ref, bdx_ref,                          # fused [wm_x | wa_x], [bm | ba]
    wmm_ref, wab_ref,                          # mem- / b- halves of the cat matmuls
    mem_out_ref, spk_out_ref, b_out_ref,
):
    hp = mem_ref.shape[-1]
    mdt = wx_ref.dtype                         # matmul operand dtype (bf16)

    mem = mem_ref[...]
    spk = spk_ref[...]
    b = b_ref[...]

    # dense_x = layer1_x(x): bf16 operands, f32 accumulate.
    dense_x = (
        jnp.dot(x_ref[...], wx_ref[...], preferred_element_type=jnp.float32)
        + bx_ref[...]
    )

    # Fused tauM/tauAdp logits for the shared dense_x operand: one [tb, 2*Hp] dot.
    z = (
        jnp.dot(dense_x.astype(mdt), wdx_ref[...], preferred_element_type=jnp.float32)
        + bdx_ref[...]
    )
    zm = z[:, :hp] + jnp.dot(mem.astype(mdt), wmm_ref[...],
                             preferred_element_type=jnp.float32)
    za = z[:, hp:] + jnp.dot(b.astype(mdt), wab_ref[...],
                             preferred_element_type=jnp.float32)

    tau_m = jax.nn.sigmoid(zm)                 # sigmoid_beta with alpha = 1.0
    tau_adp = jax.nn.sigmoid(za)

    # mem_update_adp (isAdapt=1 -> beta=1.8, b_j0=0.1, dt unused) -- all f32.
    b_j0 = 0.1
    beta = 1.8
    b_new = tau_adp * b + (1.0 - tau_adp) * spk
    B_th = b_j0 + beta * b_new
    mem_new = mem + (dense_x - mem) * tau_m
    spike = (mem_new - B_th > 0.0).astype(jnp.float32)   # ActFun_adp forward
    mem_new = (1.0 - spike) * mem_new

    mem_out_ref[...] = mem_new
    spk_out_ref[...] = spike
    b_out_ref[...] = b_new


# ----------------------------- wrapper ----------------------------------------


def prepare_params(params, matmul_dtype=jnp.bfloat16):
    """One-time weight prep: transpose, split the cat-matmuls, fuse the two
    dense_x-consuming weights/biases, pad to lane-dense shapes (multiples of
    128), cast matmul operands. Call once at model init, NOT per timestep."""
    H, I = params["wx"].shape
    Hp, Ip = _round_up(H, 128), _round_up(I, 128)

    wx_t = _pad2d(params["wx"].T.astype(jnp.float32), Ip, Hp)      # [Ip, Hp]
    wm = params["wm"].T.astype(jnp.float32)                        # [2H, H]
    wa = params["wa"].T.astype(jnp.float32)
    wm_x, wm_m = _pad2d(wm[:H], Hp, Hp), _pad2d(wm[H:], Hp, Hp)
    wa_x, wa_b = _pad2d(wa[:H], Hp, Hp), _pad2d(wa[H:], Hp, Hp)
    w_dx = jnp.concatenate([wm_x, wa_x], axis=1)                   # [Hp, 2*Hp]

    bm = _pad2d(params["bm"].reshape(1, -1).astype(jnp.float32), 1, Hp)
    ba = _pad2d(params["ba"].reshape(1, -1).astype(jnp.float32), 1, Hp)

    return {
        "input_size": I, "hidden_size": H, "Ip": Ip, "Hp": Hp,
        "matmul_dtype": matmul_dtype,
        "wx": wx_t.astype(matmul_dtype),
        "bx": _pad2d(params["bx"].reshape(1, -1).astype(jnp.float32), 1, Hp),
        "w_dx": w_dx.astype(matmul_dtype),
        "b_dx": jnp.concatenate([bm, ba], axis=1),                 # [1, 2*Hp] f32
        "wm_m": wm_m.astype(matmul_dtype),
        "wa_b": wa_b.astype(matmul_dtype),
    }


def snn_dense_cell(x_t, mem_t, spk_t, b_t, prepared, *, batch_tile=None):
    """One SNN-ltc cell step. `prepared` comes from prepare_params()."""
    B = x_t.shape[0]
    H = prepared["hidden_size"]
    Ip, Hp = prepared["Ip"], prepared["Hp"]
    mdt = prepared["matmul_dtype"]
    x_bytes = jnp.dtype(mdt).itemsize

    tb = batch_tile if batch_tile is not None else _choose_batch_tile(B, Ip, Hp, x_bytes)
    Bp = _round_up(max(B, tb), tb)

    # Pad activations / state to lane-dense, MXU-friendly shapes.
    x_p = _pad2d(x_t.astype(jnp.float32), Bp, Ip).astype(mdt)
    mem_p = _pad2d(mem_t.astype(jnp.float32), Bp, Hp)
    spk_p = _pad2d(spk_t.astype(jnp.float32), Bp, Hp)
    b_p = _pad2d(b_t.astype(jnp.float32), Bp, Hp)

    grid = (Bp // tb,)

    act_x_spec = pl.BlockSpec((tb, Ip), lambda i: (i, 0))
    act_h_spec = pl.BlockSpec((tb, Hp), lambda i: (i, 0))

    def w_spec(shape):
        # Weights: same block for every grid step -> stay VMEM-resident.
        return pl.BlockSpec(shape, lambda i: (0, 0))

    mem_out, spk_out, b_out = pl.pallas_call(
        snn_dense_cell_kernel,
        grid=grid,
        in_specs=[
            act_x_spec, act_h_spec, act_h_spec, act_h_spec,
            w_spec((Ip, Hp)), w_spec((1, Hp)),
            w_spec((Hp, 2 * Hp)), w_spec((1, 2 * Hp)),
            w_spec((Hp, Hp)), w_spec((Hp, Hp)),
        ],
        out_specs=(act_h_spec, act_h_spec, act_h_spec),
        out_shape=(
            jax.ShapeDtypeStruct((Bp, Hp), jnp.float32),   # mem_1
            jax.ShapeDtypeStruct((Bp, Hp), jnp.float32),   # spk_1
            jax.ShapeDtypeStruct((Bp, Hp), jnp.float32),   # b_1
        ),
        # mem/spk/b are pure state updates -> alias input buffers to outputs.
        input_output_aliases={1: 0, 2: 1, 3: 2},
        compiler_params=pltpu.CompilerParams(
            dimension_semantics=("parallel",),
            vmem_limit_bytes=48 * 1024 * 1024,   # fits v7x's 64 MiB physical VMEM
        ),
    )(
        x_p, mem_p, spk_p, b_p,
        prepared["wx"], prepared["bx"],
        prepared["w_dx"], prepared["b_dx"],
        prepared["wm_m"], prepared["wa_b"],
    )
    return mem_out[:B, :H], spk_out[:B, :H], b_out[:B, :H]


# ----------------------------- init & reference -------------------------------


def init_params(key, input_size, hidden_size):
    """Deterministic init mimicking nn.Linear default (uniform +/- 1/sqrt(fan_in))."""
    ks = jax.random.split(key, 6)

    def lin(kw, kb, fan_in, fan_out):
        bound = 1.0 / math.sqrt(fan_in)
        w = jax.random.uniform(kw, (fan_out, fan_in), jnp.float32, -bound, bound)
        b = jax.random.uniform(kb, (fan_out,), jnp.float32, -bound, bound)
        return w, b

    wx, bx = lin(ks[0], ks[1], input_size, hidden_size)
    wm, bm = lin(ks[2], ks[3], 2 * hidden_size, hidden_size)
    wa, ba = lin(ks[4], ks[5], 2 * hidden_size, hidden_size)
    return {"wx": wx, "bx": bx, "wm": wm, "bm": bm, "wa": wa, "ba": ba}


def reference_forward(x_t, mem_t, spk_t, b_t, params, matmul_dtype=jnp.float32):
    """Pure-JAX reference mirroring the PyTorch module.
    matmul_dtype controls the dot-operand precision (f32 = exact PyTorch math,
    bf16 = same operand precision as the Pallas kernel). Also returns the
    pre-threshold margin (mem_pre - Bth) for tolerance-aware spike checks."""
    def lin(a, w, bias):
        return jnp.dot(a.astype(matmul_dtype), w.T.astype(matmul_dtype),
                       preferred_element_type=jnp.float32) + bias

    dense_x = lin(x_t, params["wx"], params["bx"])
    tau_m = jax.nn.sigmoid(lin(jnp.concatenate([dense_x, mem_t], -1),
                               params["wm"], params["bm"]))
    tau_adp = jax.nn.sigmoid(lin(jnp.concatenate([dense_x, b_t], -1),
                                 params["wa"], params["ba"]))
    b_new = tau_adp * b_t + (1.0 - tau_adp) * spk_t
    B_th = 0.1 + 1.8 * b_new
    mem_pre = mem_t + (dense_x - mem_t) * tau_m
    margin = mem_pre - B_th
    spike = (margin > 0.0).astype(jnp.float32)
    mem_new = (1.0 - spike) * mem_pre
    return mem_new, spike, b_new, margin


def _check(name, outs, refs, atol):
    mem_k, spk_k, b_k = outs
    mem_r, spk_r, b_r, margin_r = refs
    flip = spk_k != spk_r
    # spikes must match except where the reference is essentially at threshold
    assert bool(jnp.all(~flip | (jnp.abs(margin_r) < 10.0 * atol))), f"{name}: spike mismatch"
    agree = ~flip
    assert bool(jnp.allclose(jnp.where(agree, mem_k, 0.0),
                             jnp.where(agree, mem_r, 0.0), atol=atol)), f"{name}: mem mismatch"
    assert bool(jnp.allclose(b_k, b_r, atol=atol)), f"{name}: b mismatch"


# ----------------------------- demo / self-test --------------------------------


if __name__ == "__main__":
    batch = 2
    input_size = 16
    hidden_size = 32

    key = jax.random.PRNGKey(0)
    k_param, k_x, k_mem, k_spk, k_b = jax.random.split(key, 5)

    params = init_params(k_param, input_size, hidden_size)

    x_t = jax.random.normal(k_x, (batch, input_size), jnp.float32)
    mem_t = jax.random.normal(k_mem, (batch, hidden_size), jnp.float32) * 0.1
    spk_t = (jax.random.uniform(k_spk, (batch, hidden_size)) > 0.5).astype(jnp.float32)
    b_t = jnp.full((batch, hidden_size), 0.1, jnp.float32) \
        + 0.05 * jax.random.normal(k_b, (batch, hidden_size), jnp.float32)

    # --- primary (performance) config: bf16 MXU operands, f32 accumulation ---
    prepared_bf16 = prepare_params(params, matmul_dtype=jnp.bfloat16)
    out_bf16 = snn_dense_cell(x_t, mem_t, spk_t, b_t, prepared_bf16)
    jax.block_until_ready(out_bf16)

    # check against a pure-JAX mirror using the same bf16 operand precision
    ref_bf16 = reference_forward(x_t, mem_t, spk_t, b_t, params, matmul_dtype=jnp.bfloat16)
    _check("bf16", out_bf16, ref_bf16, atol=5e-3)

    # --- strict f32 config: bit-level check against exact PyTorch semantics ---
    prepared_f32 = prepare_params(params, matmul_dtype=jnp.float32)
    out_f32 = snn_dense_cell(x_t, mem_t, spk_t, b_t, prepared_f32)
    jax.block_until_ready(out_f32)

    ref_f32 = reference_forward(x_t, mem_t, spk_t, b_t, params, matmul_dtype=jnp.float32)
    _check("f32", out_f32, ref_f32, atol=1e-5)

    # bf16 kernel should also stay close to the exact f32 semantics (spike-free state)
    assert bool(jnp.allclose(out_bf16[2], ref_f32[2], atol=5e-2)), "b vs f32 ref mismatch"

    print("KERNEL_OK")
</pallas_src>

<mosaic_0001>
module attributes {stable_mosaic.version = 11 : i64} {
  func.func @snn_dense_cell_kernel(%arg0: i32, %arg1: memref<8x128xbf16, #tpu.memory_space<vmem>>, %arg2: memref<8x128xf32, #tpu.memory_space<vmem>>, %arg3: memref<8x128xf32, #tpu.memory_space<vmem>>, %arg4: memref<8x128xf32, #tpu.memory_space<vmem>>, %arg5: memref<128x128xbf16, #tpu.memory_space<vmem>>, %arg6: memref<1x128xf32, #tpu.memory_space<vmem>>, %arg7: memref<128x256xbf16, #tpu.memory_space<vmem>>, %arg8: memref<1x256xf32, #tpu.memory_space<vmem>>, %arg9: memref<128x128xbf16, #tpu.memory_space<vmem>>, %arg10: memref<128x128xbf16, #tpu.memory_space<vmem>>, %arg11: memref<8x128xf32, #tpu.memory_space<vmem>>, %arg12: memref<8x128xf32, #tpu.memory_space<vmem>>, %arg13: memref<8x128xf32, #tpu.memory_space<vmem>>) attributes {dimension_semantics = [#tpu.dimension_semantics<parallel>], iteration_bounds = array<i64: 1>, scalar_prefetch = 0 : i64, scratch_operands = 0 : i64, tpu.core_type = #tpu.core_type<tc>, window_params = [{transform_indices = @transform_0, window_bounds = array<i64: 8, 128>}, {transform_indices = @transform_1, window_bounds = array<i64: 8, 128>}, {transform_indices = @transform_2, window_bounds = array<i64: 8, 128>}, {transform_indices = @transform_3, window_bounds = array<i64: 8, 128>}, {pipeline_mode = #tpu.pipeline_mode<synchronous>, transform_indices = @transform_4, window_bounds = array<i64: 128, 128>}, {pipeline_mode = #tpu.pipeline_mode<synchronous>, transform_indices = @transform_5, window_bounds = array<i64: 1, 128>}, {pipeline_mode = #tpu.pipeline_mode<synchronous>, transform_indices = @transform_6, window_bounds = array<i64: 128, 256>}, {pipeline_mode = #tpu.pipeline_mode<synchronous>, transform_indices = @transform_7, window_bounds = array<i64: 1, 256>}, {pipeline_mode = #tpu.pipeline_mode<synchronous>, transform_indices = @transform_8, window_bounds = array<i64: 128, 128>}, {pipeline_mode = #tpu.pipeline_mode<synchronous>, transform_indices = @transform_9, window_bounds = array<i64: 128, 128>}, {transform_indices = @transform_10, window_bounds = array<i64: 8, 128>}, {transform_indices = @transform_11, window_bounds = array<i64: 8, 128>}, {transform_indices = @transform_12, window_bounds = array<i64: 8, 128>}]} {
    %c0 = arith.constant 0 : index
    %c0_0 = arith.constant 0 : index
    %0 = vector.load %arg2[%c0, %c0_0] : memref<8x128xf32, #tpu.memory_space<vmem>>, vector<8x128xf32>
    %c0_1 = arith.constant 0 : index
    %c0_2 = arith.constant 0 : index
    %1 = vector.load %arg3[%c0_1, %c0_2] : memref<8x128xf32, #tpu.memory_space<vmem>>, vector<8x128xf32>
    %c0_3 = arith.constant 0 : index
    %c0_4 = arith.constant 0 : index
    %2 = vector.load %arg4[%c0_3, %c0_4] : memref<8x128xf32, #tpu.memory_space<vmem>>, vector<8x128xf32>
    %c0_5 = arith.constant 0 : index
    %c0_6 = arith.constant 0 : index
    %3 = vector.load %arg1[%c0_5, %c0_6] : memref<8x128xbf16, #tpu.memory_space<vmem>>, vector<8x128xbf16>
    %c0_7 = arith.constant 0 : index
    %c0_8 = arith.constant 0 : index
    %4 = vector.load %arg5[%c0_7, %c0_8] : memref<128x128xbf16, #tpu.memory_space<vmem>>, vector<128x128xbf16>
    %cst = arith.constant dense<0.000000e+00> : vector<8x128xf32>
    %5 = tpu.matmul %3, %4, %cst {dimension_numbers = #tpu.dot_dimension_numbers<[1], [0], [0], [1], [0, 0, 1, 1], [], []>} : vector<8x128xbf16>, vector<128x128xbf16>, vector<8x128xf32> -> vector<8x128xf32>
    %c0_9 = arith.constant 0 : index
    %c0_10 = arith.constant 0 : index
    %6 = vector.load %arg6[%c0_9, %c0_10] : memref<1x128xf32, #tpu.memory_space<vmem>>, vector<1x128xf32>
    %7 = vector.broadcast %6 : vector<1x128xf32> to vector<8x128xf32>
    %8 = arith.addf %5, %7 : vector<8x128xf32>
    %9 = arith.truncf %8 : vector<8x128xf32> to vector<8x128xbf16>
    %c0_11 = arith.constant 0 : index
    %c0_12 = arith.constant 0 : index
    %10 = vector.load %arg7[%c0_11, %c0_12] : memref<128x256xbf16, #tpu.memory_space<vmem>>, vector<128x256xbf16>
    %cst_13 = arith.constant dense<0.000000e+00> : vector<8x256xf32>
    %11 = tpu.matmul %9, %10, %cst_13 {dimension_numbers = #tpu.dot_dimension_numbers<[1], [0], [0], [1], [0, 0, 1, 1], [], []>} : vector<8x128xbf16>, vector<128x256xbf16>, vector<8x256xf32> -> vector<8x256xf32>
    %c0_14 = arith.constant 0 : index
    %c0_15 = arith.constant 0 : index
    %12 = vector.load %arg8[%c0_14, %c0_15] : memref<1x256xf32, #tpu.memory_space<vmem>>, vector<1x256xf32>
    %13 = vector.broadcast %12 : vector<1x256xf32> to vector<8x256xf32>
    %14 = arith.addf %11, %13 : vector<8x256xf32>
    %15 = vector.extract_strided_slice %14 {offsets = [0, 0], sizes = [8, 128], strides = [1, 1]} : vector<8x256xf32> to vector<8x128xf32>
    %16 = arith.truncf %0 : vector<8x128xf32> to vector<8x128xbf16>
    %c0_16 = arith.constant 0 : index
    %c0_17 = arith.constant 0 : index
    %17 = vector.load %arg9[%c0_16, %c0_17] : memref<128x128xbf16, #tpu.memory_space<vmem>>, vector<128x128xbf16>
    %cst_18 = arith.constant dense<0.000000e+00> : vector<8x128xf32>
    %18 = tpu.matmul %16, %17, %cst_18 {dimension_numbers = #tpu.dot_dimension_numbers<[1], [0], [0], [1], [0, 0, 1, 1], [], []>} : vector<8x128xbf16>, vector<128x128xbf16>, vector<8x128xf32> -> vector<8x128xf32>
    %19 = arith.addf %15, %18 : vector<8x128xf32>
    %20 = vector.extract_strided_slice %14 {offsets = [0, 128], sizes = [8, 128], strides = [1, 1]} : vector<8x256xf32> to vector<8x128xf32>
    %21 = arith.truncf %2 : vector<8x128xf32> to vector<8x128xbf16>
    %c0_19 = arith.constant 0 : index
    %c0_20 = arith.constant 0 : index
    %22 = vector.load %arg10[%c0_19, %c0_20] : memref<128x128xbf16, #tpu.memory_space<vmem>>, vector<128x128xbf16>
    %cst_21 = arith.constant dense<0.000000e+00> : vector<8x128xf32>
    %23 = tpu.matmul %21, %22, %cst_21 {dimension_numbers = #tpu.dot_dimension_numbers<[1], [0], [0], [1], [0, 0, 1, 1], [], []>} : vector<8x128xbf16>, vector<128x128xbf16>, vector<8x128xf32> -> vector<8x128xf32>
    %24 = arith.addf %20, %23 : vector<8x128xf32>
    %25 = arith.negf %19 : vector<8x128xf32>
    %26 = math.exp %25 : vector<8x128xf32>
    %cst_22 = arith.constant 1.000000e+00 : f32
    %27 = vector.broadcast %cst_22 : f32 to vector<8x128xf32>
    %28 = arith.addf %27, %26 : vector<8x128xf32>
    %29 = arith.divf %27, %28 : vector<8x128xf32>
    %30 = arith.negf %24 : vector<8x128xf32>
    %31 = math.exp %30 : vector<8x128xf32>
    %cst_23 = arith.constant 1.000000e+00 : f32
    %32 = vector.broadcast %cst_23 : f32 to vector<8x128xf32>
    %33 = arith.addf %32, %31 : vector<8x128xf32>
    %34 = arith.divf %32, %33 : vector<8x128xf32>
    %35 = arith.mulf %34, %2 : vector<8x128xf32>
    %cst_24 = arith.constant 1.000000e+00 : f32
    %36 = vector.broadcast %cst_24 : f32 to vector<8x128xf32>
    %37 = arith.subf %36, %34 : vector<8x128xf32>
    %38 = arith.mulf %37, %1 : vector<8x128xf32>
    %39 = arith.addf %35, %38 : vector<8x128xf32>
    %cst_25 = arith.constant 1.800000e+00 : f32
    %40 = vector.broadcast %cst_25 : f32 to vector<8x128xf32>
    %41 = arith.mulf %40, %39 : vector<8x128xf32>
    %cst_26 = arith.constant 1.000000e-01 : f32
    %42 = vector.broadcast %cst_26 : f32 to vector<8x128xf32>
    %43 = arith.addf %42, %41 : vector<8x128xf32>
    %44 = arith.subf %8, %0 : vector<8x128xf32>
    %45 = arith.mulf %44, %29 : vector<8x128xf32>
    %46 = arith.addf %0, %45 : vector<8x128xf32>
    %47 = arith.subf %46, %43 : vector<8x128xf32>
    %cst_27 = arith.constant 0.000000e+00 : f32
    %48 = vector.broadcast %cst_27 : f32 to vector<8x128xf32>
    %49 = arith.cmpf ogt, %47, %48 : vector<8x128xf32>
    %50 = arith.extui %49 : vector<8x128xi1> to vector<8x128xi32>
    %51 = arith.sitofp %50 : vector<8x128xi32> to vector<8x128xf32>
    %cst_28 = arith.constant 1.000000e+00 : f32
    %52 = vector.broadcast %cst_28 : f32 to vector<8x128xf32>
    %53 = arith.subf %52, %51 : vector<8x128xf32>
    %54 = arith.mulf %53, %46 : vector<8x128xf32>
    %c0_29 = arith.constant 0 : index
    %c0_30 = arith.constant 0 : index
    %55 = vector.load %arg11[%c0_29, %c0_30] : memref<8x128xf32, #tpu.memory_space<vmem>>, vector<8x128xf32>
    tpu.vector_store %arg11[%c0_29, %c0_30], %54 {strides = array<i32>} : memref<8x128xf32, #tpu.memory_space<vmem>>, vector<8x128xf32>,
    %c0_31 = arith.constant 0 : index
    %c0_32 = arith.constant 0 : index
    %56 = vector.load %arg12[%c0_31, %c0_32] : memref<8x128xf32, #tpu.memory_space<vmem>>, vector<8x128xf32>
    tpu.vector_store %arg12[%c0_31, %c0_32], %51 {strides = array<i32>} : memref<8x128xf32, #tpu.memory_space<vmem>>, vector<8x128xf32>,
    %c0_33 = arith.constant 0 : index
    %c0_34 = arith.constant 0 : index
    %57 = vector.load %arg13[%c0_33, %c0_34] : memref<8x128xf32, #tpu.memory_space<vmem>>, vector<8x128xf32>
    tpu.vector_store %arg13[%c0_33, %c0_34], %39 {strides = array<i32>} : memref<8x128xf32, #tpu.memory_space<vmem>>, vector<8x128xf32>,
    return
  }
  func.func @transform_0(%arg0: i32) -> (i32, i32) {
    %c0_i32 = arith.constant 0 : i32
    %c0_i32_0 = arith.constant 0 : i32
    return %arg0, %c0_i32 : i32, i32
  }
  func.func @transform_1(%arg0: i32) -> (i32, i32) {
    %c0_i32 = arith.constant 0 : i32
    %c0_i32_0 = arith.constant 0 : i32
    return %arg0, %c0_i32 : i32, i32
  }
  func.func @transform_2(%arg0: i32) -> (i32, i32) {
    %c0_i32 = arith.constant 0 : i32
    %c0_i32_0 = arith.constant 0 : i32
    return %arg0, %c0_i32 : i32, i32
  }
  func.func @transform_3(%arg0: i32) -> (i32, i32) {
    %c0_i32 = arith.constant 0 : i32
    %c0_i32_0 = arith.constant 0 : i32
    return %arg0, %c0_i32 : i32, i32
  }
  func.func @transform_4(%arg0: i32) -> (i32, i32) {
    %c0_i32 = arith.constant 0 : i32
    %c0_i32_0 = arith.constant 0 : i32
    %c0_i32_1 = arith.constant 0 : i32
    return %c0_i32, %c0_i32_0 : i32, i32
  }
  func.func @transform_5(%arg0: i32) -> (i32, i32) {
    %c0_i32 = arith.constant 0 : i32
    %c0_i32_0 = arith.constant 0 : i32
    %c0_i32_1 = arith.constant 0 : i32
    return %c0_i32, %c0_i32_0 : i32, i32
  }
  func.func @transform_6(%arg0: i32) -> (i32, i32) {
    %c0_i32 = arith.constant 0 : i32
    %c0_i32_0 = arith.constant 0 : i32
    %c0_i32_1 = arith.constant 0 : i32
    return %c0_i32, %c0_i32_0 : i32, i32
  }
  func.func @transform_7(%arg0: i32) -> (i32, i32) {
    %c0_i32 = arith.constant 0 : i32
    %c0_i32_0 = arith.constant 0 : i32
    %c0_i32_1 = arith.constant 0 : i32
    return %c0_i32, %c0_i32_0 : i32, i32
  }
  func.func @transform_8(%arg0: i32) -> (i32, i32) {
    %c0_i32 = arith.constant 0 : i32
    %c0_i32_0 = arith.constant 0 : i32
    %c0_i32_1 = arith.constant 0 : i32
    return %c0_i32, %c0_i32_0 : i32, i32
  }
  func.func @transform_9(%arg0: i32) -> (i32, i32) {
    %c0_i32 = arith.constant 0 : i32
    %c0_i32_0 = arith.constant 0 : i32
    %c0_i32_1 = arith.constant 0 : i32
    return %c0_i32, %c0_i32_0 : i32, i32
  }
  func.func @transform_10(%arg0: i32) -> (i32, i32) {
    %c0_i32 = arith.constant 0 : i32
    %c0_i32_0 = arith.constant 0 : i32
    return %arg0, %c0_i32 : i32, i32
  }
  func.func @transform_11(%arg0: i32) -> (i32, i32) {
    %c0_i32 = arith.constant 0 : i32
    %c0_i32_0 = arith.constant 0 : i32
    return %arg0, %c0_i32 : i32, i32
  }
  func.func @transform_12(%arg0: i32) -> (i32, i32) {
    %c0_i32 = arith.constant 0 : i32
    %c0_i32_0 = arith.constant 0 : i32
    return %arg0, %c0_i32 : i32, i32
  }
}

</mosaic_0001>

<llo_original>
// kernel: tpu_custom_call.1
$region0: #{tpu_custom_call.1}
  #allocation0 [shape = 'u32[]', space=smem, size = 0x4, offset = 0x4, fixed_abs, tag = 'smem constant byte address 0x4 - core index']
  #allocation1 [shape = 'u32[144,128]{1,0:T(1,128)}', space=vmem, size = 0x12000, scoped, tag = 'internal scratch']
  %s0 = inlined_call_operand.vmem [shape: bf16[8,128], index: 0, kind: input, shape index: {}]
  %s1 = inlined_call_operand.hbm [shape: f32[8,128], index: 1, kind: input, shape index: {}, may-alias: {1,10}]
  %s2 = inlined_call_operand.hbm [shape: f32[8,128], index: 2, kind: input, shape index: {}, may-alias: {2,11}]
  %s3 = inlined_call_operand.hbm [shape: f32[8,128], index: 3, kind: input, shape index: {}, may-alias: {3,12}]
  %s4 = inlined_call_operand.vmem [shape: bf16[128,128], index: 4, kind: input, shape index: {}]
  %s5 = inlined_call_operand.hbm [shape: f32[1,128], index: 5, kind: input, shape index: {}]
  %s6 = inlined_call_operand.hbm [shape: bf16[128,256], index: 6, kind: input, shape index: {}]
  %s7 = inlined_call_operand.vmem [shape: f32[1,256], index: 7, kind: input, shape index: {}]
  %s8 = inlined_call_operand.hbm [shape: bf16[128,128], index: 8, kind: input, shape index: {}]
  %s9 = inlined_call_operand.hbm [shape: bf16[128,128], index: 9, kind: input, shape index: {}]
  %s10 = inlined_call_operand.hbm [shape: f32[8,128], index: 10, kind: output, shape index: {0}, may-alias: {1,10}]
  %s11 = inlined_call_operand.hbm [shape: f32[8,128], index: 11, kind: output, shape index: {1}, may-alias: {2,11}]
  %s12 = inlined_call_operand.hbm [shape: f32[8,128], index: 12, kind: output, shape index: {2}, may-alias: {3,12}]
  %13 = xla_tuple %s10, %s11, %s12
  %s14 = sld [smem:[#allocation0]]
  $region94: #{tpu_custom_call.1} parent=0
    _
  %s16 = ssub.s32 1, %s14
  %s17 = scalar_select 0, %s16, %s14
  $region1: #{tpu_custom_call.1} parent=0
    #allocation2 [shape = 'u8[4096]{0}', space=vmem, size = 0x1000, scoped, tag = 'input window, operand 1, single buffered']
    #allocation3 [shape = 's32[1]{0}', space=sflag, size = 0x4, scoped, tag = 'scoped memory for tpu_custom_call.1']
    #allocation4 [shape = 's32[1]{0}', space=sflag, size = 0x4, scoped, tag = 'scoped memory for tpu_custom_call.1']
    #allocation5 [shape = 'u8[4096]{0}', space=vmem, size = 0x1000, scoped, tag = 'input window, operand 2, single buffered']
    #allocation6 [shape = 's32[1]{0}', space=sflag, size = 0x4, scoped, tag = 'scoped memory for tpu_custom_call.1']
    #allocation7 [shape = 'u8[4096]{0}', space=vmem, size = 0x1000, scoped, tag = 'input window, operand 3, single buffered']
    #allocation8 [shape = 'u8[512]{0}', space=vmem, size = 0x400, scoped, tag = 'input window, operand 5, single buffered']
    #allocation9 [shape = 's32[1]{0}', space=sflag, size = 0x4, scoped, tag = 'scoped memory for tpu_custom_call.1']
    #allocation10 [shape = 'u8[65536]{0}', space=vmem, size = 0x10000, scoped, tag = 'input window, operand 6, single buffered']
    #allocation11 [shape = 'u8[32768]{0}', space=vmem, size = 0x8000, scoped, tag = 'input window, operand 8, single buffered']
    #allocation12 [shape = 's32[1]{0}', space=sflag, size = 0x4, scoped, tag = 'scoped memory for tpu_custom_call.1']
    #allocation13 [shape = 'u8[32768]{0}', space=vmem, size = 0x8000, scoped, tag = 'input window, operand 9, single buffered']
    #allocation14 [shape = 'u8[4096]{0}', space=vmem, size = 0x1000, scoped, tag = 'output window, operand 0, single buffered']
    #allocation15 [shape = 'u8[4096]{0}', space=vmem, size = 0x1000, scoped, tag = 'output window, operand 1, single buffered']
    #allocation16 [shape = 's32[1]{0}', space=sflag, size = 0x4, scoped, tag = 'scoped memory for tpu_custom_call.1']
    #allocation17 [shape = 'u8[4096]{0}', space=vmem, size = 0x1000, scoped, tag = 'output window, operand 2, single buffered']
    %18 = vsyncpa [#allocation3], 0
    %19 = vsyncpa [#allocation6], 0
    %20 = vsyncpa [#allocation9], 0
    %21 = vsyncpa [#allocation12], 0
    %22 = vsyncpa [#allocation4], 0
    %23 = vsyncpa [#allocation16], 0
    // Predicated region
    $region2: #{tpu_custom_call.1} parent=1 // pred_check
      _
    $region3: #{tpu_custom_call.1} parent=1 // pred_check_branch
      %25 = sbr.rel (0) target = $region5
    $region4: #{tpu_custom_call.1} parent=1 // pred_region
      _
    $region5: #{tpu_custom_call.1} parent=1 // pred_fallthru
      _
    // Predicated region
    $region6: #{tpu_custom_call.1} parent=1 // pred_check
      _
    $region7: #{tpu_custom_call.1} parent=1 // pred_check_branch
      %27 = sbr.rel (0) target = $region9
    $region8: #{tpu_custom_call.1} parent=1 // pred_region
      %s29 = ssub.s32 128, 128
      %30 = vsyncadd [#allocation3], %s29
      %s32 = sshll.u32 [#allocation2], 4
      %s33 = int_to_ptr.vmem [resolvable:$true] %s32
      %35 = dma.hbm_to_vmem [thread:$0]  %s1, 128, %s33, [#allocation3]
    $region9: #{tpu_custom_call.1} parent=1 // pred_fallthru
      _
    // Predicated region
    $region10: #{tpu_custom_call.1} parent=1 // pred_check
      _
    $region11: #{tpu_custom_call.1} parent=1 // pred_check_branch
      %37 = sbr.rel (0) target = $region13
    $region12: #{tpu_custom_call.1} parent=1 // pred_region
      %s39 = ssub.s32 128, 128
      %40 = vsyncadd [#allocation6], %s39
      %s42 = sshll.u32 [#allocation5], 4
      %s43 = int_to_ptr.vmem [resolvable:$true] %s42
      %45 = dma.hbm_to_vmem [thread:$0]  %s2, 128, %s43, [#allocation6]
    $region13: #{tpu_custom_call.1} parent=1 // pred_fallthru
      _
    // Predicated region
    $region14: #{tpu_custom_call.1} parent=1 // pred_check
      _
    $region15: #{tpu_custom_call.1} parent=1 // pred_check_branch
      %47 = sbr.rel (0) target = $region17
    $region16: #{tpu_custom_call.1} parent=1 // pred_region
      %s49 = ssub.s32 128, 128
      %50 = vsyncadd [#allocation6], %s49
      %s52 = sshll.u32 [#allocation7], 4
      %s53 = int_to_ptr.vmem [resolvable:$true] %s52
      %55 = dma.hbm_to_vmem [thread:$0]  %s3, 128, %s53, [#allocation6]
    $region17: #{tpu_custom_call.1} parent=1 // pred_fallthru
      _
    // Predicated region
    $region18: #{tpu_custom_call.1} parent=1 // pred_check
      _
    $region19: #{tpu_custom_call.1} parent=1 // pred_check_branch
      %57 = sbr.rel (0) target = $region21
    $region20: #{tpu_custom_call.1} parent=1 // pred_region
      _
    $region21: #{tpu_custom_call.1} parent=1 // pred_fallthru
      _
    // Predicated region
    $region22: #{tpu_custom_call.1} parent=1 // pred_check
      _
    $region23: #{tpu_custom_call.1} parent=1 // pred_check_branch
      %59 = sbr.rel (0) target = $region25
    $region24: #{tpu_custom_call.1} parent=1 // pred_region
      %s61 = ssub.s32 16, 16
      %62 = vsyncadd [#allocation9], %s61
      %s64 = sshll.u32 [#allocation8], 4
      %s65 = int_to_ptr.vmem [resolvable:$true] %s64
      %67 = dma.hbm_to_vmem [thread:$0]  %s5, 16, %s65, [#allocation9]
    $region25: #{tpu_custom_call.1} parent=1 // pred_fallthru
      _
    // Predicated region
    $region26: #{tpu_custom_call.1} parent=1 // pred_check
      _
    $region27: #{tpu_custom_call.1} parent=1 // pred_check_branch
      %69 = sbr.rel (0) target = $region29
    $region28: #{tpu_custom_call.1} parent=1 // pred_region
      %s71 = ssub.s32 2048, 2048
      %72 = vsyncadd [#allocation9], %s71
      %s73 = sshll.u32 [#allocation10], 4
      %s74 = int_to_ptr.vmem [resolvable:$true] %s73
      %79 = dma.hbm_to_vmem [thread:$0]  %s6, 2048, %s74, [#allocation9], 128, 128, 8
    $region29: #{tpu_custom_call.1} parent=1 // pred_fallthru
      _
    // Predicated region
    $region30: #{tpu_custom_call.1} parent=1 // pred_check
      _
    $region31: #{tpu_custom_call.1} parent=1 // pred_check_branch
      %81 = sbr.rel (0) target = $region33
    $region32: #{tpu_custom_call.1} parent=1 // pred_region
      _
    $region33: #{tpu_custom_call.1} parent=1 // pred_fallthru
      _
    // Predicated region
    $region34: #{tpu_custom_call.1} parent=1 // pred_check
      _
    $region35: #{tpu_custom_call.1} parent=1 // pred_check_branch
      %83 = sbr.rel (0) target = $region37
    $region36: #{tpu_custom_call.1} parent=1 // pred_region
      %s85 = ssub.s32 1024, 1024
      %86 = vsyncadd [#allocation12], %s85
      %s87 = sshll.u32 [#allocation11], 4
      %s88 = int_to_ptr.vmem [resolvable:$true] %s87
      %93 = dma.hbm_to_vmem [thread:$0]  %s8, 1024, %s88, [#allocation12], 64, 64, 4
    $region37: #{tpu_custom_call.1} parent=1 // pred_fallthru
      _
    // Predicated region
    $region38: #{tpu_custom_call.1} parent=1 // pred_check
      _
    $region39: #{tpu_custom_call.1} parent=1 // pred_check_branch
      %95 = sbr.rel (0) target = $region41
    $region40: #{tpu_custom_call.1} parent=1 // pred_region
      %s97 = ssub.s32 1024, 1024
      %98 = vsyncadd [#allocation12], %s97
      %s99 = sshll.u32 [#allocation13], 4
      %s100 = int_to_ptr.vmem [resolvable:$true] %s99
      %105 = dma.hbm_to_vmem [thread:$0]  %s9, 1024, %s100, [#allocation12], 64, 64, 4
    $region41: #{tpu_custom_call.1} parent=1 // pred_fallthru
      _
    // Predicated region
    $region42: #{tpu_custom_call.1} parent=1 // pred_check
      _
    $region43: #{tpu_custom_call.1} parent=1 // pred_check_branch
      %107 = sbr.rel (0) target = $region45
    $region44: #{tpu_custom_call.1} parent=1 // pred_region
      %108 = dma.done [#allocation3], 128
    $region45: #{tpu_custom_call.1} parent=1 // pred_fallthru
      _
    // Predicated region
    $region46: #{tpu_custom_call.1} parent=1 // pred_check
      _
    $region47: #{tpu_custom_call.1} parent=1 // pred_check_branch
      %110 = sbr.rel (0) target = $region49
    $region48: #{tpu_custom_call.1} parent=1 // pred_region
      %111 = dma.done [#allocation6], 128
    $region49: #{tpu_custom_call.1} parent=1 // pred_fallthru
      _
    // Predicated region
    $region50: #{tpu_custom_call.1} parent=1 // pred_check
      _
    $region51: #{tpu_custom_call.1} parent=1 // pred_check_branch
      %113 = sbr.rel (0) target = $region53
    $region52: #{tpu_custom_call.1} parent=1 // pred_region
      %114 = dma.done [#allocation6], 128
    $region53: #{tpu_custom_call.1} parent=1 // pred_fallthru
      _
    // Predicated region
    $region54: #{tpu_custom_call.1} parent=1 // pred_check
      _
    $region55: #{tpu_custom_call.1} parent=1 // pred_check_branch
      %116 = sbr.rel (0) target = $region57
    $region56: #{tpu_custom_call.1} parent=1 // pred_region
      %117 = dma.done [#allocation9], 16
    $region57: #{tpu_custom_call.1} parent=1 // pred_fallthru
      _
    // Predicated region
    $region58: #{tpu_custom_call.1} parent=1 // pred_check
      _
    $region59: #{tpu_custom_call.1} parent=1 // pred_check_branch
      %119 = sbr.rel (0) target = $region61
    $region60: #{tpu_custom_call.1} parent=1 // pred_region
      %120 = dma.done [#allocation9], 2048
    $region61: #{tpu_custom_call.1} parent=1 // pred_fallthru
      _
    // Predicated region
    $region62: #{tpu_custom_call.1} parent=1 // pred_check
      _
    $region63: #{tpu_custom_call.1} parent=1 // pred_check_branch
      %122 = sbr.rel (0) target = $region65
    $region64: #{tpu_custom_call.1} parent=1 // pred_region
      %123 = dma.done [#allocation12], 1024
    $region65: #{tpu_custom_call.1} parent=1 // pred_fallthru
      _
    // Predicated region
    $region66: #{tpu_custom_call.1} parent=1 // pred_check
      _
    $region67: #{tpu_custom_call.1} parent=1 // pred_check_branch
      %125 = sbr.rel (0) target = $region69
    $region68: #{tpu_custom_call.1} parent=1 // pred_region
      %126 = dma.done [#allocation12], 1024
    $region69: #{tpu_custom_call.1} parent=1 // pred_fallthru
      _
    %v128 = vld [vmem:[#allocation2] sm:$0xff]
    %v129 = vld [vmem:[#allocation5] sm:$0xff]
    %v130 = vld [vmem:[#allocation7] sm:$0xff]
    %v131 = vld [vmem:[%s0] sm:$0xf]
    %v132 = vld [vmem:[%s4] sm:$0xf]
    %v133 = vld [vmem:[%s4 + $0x4] sm:$0xf]
    %v134 = vld [vmem:[%s4 + $0x8] sm:$0xf]
    %v135 = vld [vmem:[%s4 + $0xc] sm:$0xf]
    %v136 = vld [vmem:[%s4 + $0x10] sm:$0xf]
    %v137 = vld [vmem:[%s4 + $0x14] sm:$0xf]
    %v138 = vld [vmem:[%s4 + $0x18] sm:$0xf]
    %v139 = vld [vmem:[%s4 + $0x1c] sm:$0xf]
    %v140 = vld [vmem:[%s4 + $0x20] sm:$0xf]
    %v141 = vld [vmem:[%s4 + $0x24] sm:$0xf]
    %v142 = vld [vmem:[%s4 + $0x28] sm:$0xf]
    %v143 = vld [vmem:[%s4 + $0x2c] sm:$0xf]
    %v144 = vld [vmem:[%s4 + $0x30] sm:$0xf]
    %v145 = vld [vmem:[%s4 + $0x34] sm:$0xf]
    %v146 = vld [vmem:[%s4 + $0x38] sm:$0xf]
    %v147 = vld [vmem:[%s4 + $0x3c] sm:$0xf]
    %v148 = vld [vmem:[#allocation8] sm:$0x1]
    %v150 = vlaneseq
    %v151 = vshrl.u32 %v150, 7
    %v152 = vsub.s32 0, %v151
    %v153 = vrot.slane %v148, %v152
    %v171 = vunpack.c.l.b16 %v132
    %v172 = vunpack.c.l.b16 %v133
    %v173 = vunpack.c.l.b16 %v134
    %v174 = vunpack.c.l.b16 %v135
    %v175 = vunpack.c.l.b16 %v136
    %v176 = vunpack.c.l.b16 %v137
    %v177 = vunpack.c.l.b16 %v138
    %v178 = vunpack.c.l.b16 %v139
    %v179 = vunpack.c.l.b16 %v140
    %v180 = vunpack.c.l.b16 %v141
    %v181 = vunpack.c.l.b16 %v142
    %v182 = vunpack.c.l.b16 %v143
    %v183 = vunpack.c.l.b16 %v144
    %v184 = vunpack.c.l.b16 %v145
    %v185 = vunpack.c.l.b16 %v146
    %v186 = vunpack.c.l.b16 %v147
    %v187 = vpack.c.b16 %v172, %v171
    %v188 = vpack.c.b16 %v174, %v173
    %v189 = vpack.c.b16 %v176, %v175
    %v190 = vpack.c.b16 %v178, %v177
    %v191 = vpack.c.b16 %v180, %v179
    %v192 = vpack.c.b16 %v182, %v181
    %v193 = vpack.c.b16 %v184, %v183
    %v194 = vpack.c.b16 %v186, %v185
    %203 = vmatprep.subr.bf16.mxu0 0
    %204 = vmatpush1.bf16.msra.mxu0 %v187
    %205 = vmatprep.subr.bf16.mxu0 0
    %206 = vmatpush1.bf16.msra.mxu0 %v188
    %207 = vmatprep.subr.bf16.mxu0 0
    %208 = vmatpush1.bf16.msra.mxu0 %v189
    %209 = vmatprep.subr.bf16.mxu0 0
    %210 = vmatpush1.bf16.msra.mxu0 %v190
    %211 = vmatprep.subr.bf16.mxu0 0
    %212 = vmatpush1.bf16.msra.mxu0 %v191
    %213 = vmatprep.subr.bf16.mxu0 0
    %214 = vmatpush1.bf16.msra.mxu0 %v192
    %215 = vmatprep.subr.bf16.mxu0 0
    %216 = vmatpush1.bf16.msra.mxu0 %v193
    %217 = vmatprep.subr.bf16.mxu0 0
    %218 = vmatpush1.bf16.msra.mxu0 %v194
    %219 = vmatprep.subr.bf16.mxu0 0
    %220 = vmatpush1.bf16.msra.mxu0 0
    %221 = vmatprep.subr.bf16.mxu0 0
    %222 = vmatpush1.bf16.msra.mxu0 0
    %223 = vmatprep.subr.bf16.mxu0 0
    %224 = vmatpush1.bf16.msra.mxu0 0
    %225 = vmatprep.subr.bf16.mxu0 0
    %226 = vmatpush1.bf16.msra.mxu0 0
    %227 = vmatprep.subr.bf16.mxu0 0
    %228 = vmatpush1.bf16.msra.mxu0 0
    %229 = vmatprep.subr.bf16.mxu0 0
    %230 = vmatpush1.bf16.msra.mxu0 0
    %231 = vmatprep.subr.bf16.mxu0 0
    %232 = vmatpush1.bf16.msra.mxu0 0
    %233 = vmatprep.subr.bf16.mxu0 0
    %234 = vmatpush1.bf16.msra.mxu0 0
    %235 = vmatprep.mubr.bf16.mxu0 0
    %236 = vmatmul.mubr.bf16.gmra.mrb[0].mxu0 %v131
    %v237 = vpop.f32.mrb[0].mxu0
    %v238 = vadd.f32 %v153, %v237
    %v239 = vpop.f32.mrb[0].mxu0
    %v240 = vpop.f32.mrb[0].mxu0
    %v241 = vpop.f32.mrb[0].mxu0
    %242 = vdwg.mxu0
    %v243 = vpack.c.bf16 %v238, %v238
    %v244 = vld [vmem:[#allocation10] sm:$0xff]
    %v245 = vld [vmem:[#allocation10 + $0x8] sm:$0xff]
    %v246 = vld [vmem:[#allocation10 + $0x10] sm:$0xff]
    %v247 = vld [vmem:[#allocation10 + $0x18] sm:$0xff]
    %v248 = vld [vmem:[#allocation10 + $0x20] sm:$0xff]
    %v249 = vld [vmem:[#allocation10 + $0x28] sm:$0xff]
    %v250 = vld [vmem:[#allocation10 + $0x30] sm:$0xff]
    %v251 = vld [vmem:[#allocation10 + $0x38] sm:$0xff]
    %v252 = vld [vmem:[#allocation10 + $0x40] sm:$0xff]
    %v253 = vld [vmem:[#allocation10 + $0x48] sm:$0xff]
    %v254 = vld [vmem:[#allocation10 + $0x50] sm:$0xff]
    %v255 = vld [vmem:[#allocation10 + $0x58] sm:$0xff]
    %v256 = vld [vmem:[#allocation10 + $0x60] sm:$0xff]
    %v257 = vld [vmem:[#allocation10 + $0x68] sm:$0xff]
    %v258 = vld [vmem:[#allocation10 + $0x70] sm:$0xff]
    %v259 = vld [vmem:[#allocation10 + $0x78] sm:$0xff]
    %v260 = vld [vmem:[%s7] sm:$0x3]
    %v262 = vlaneseq
    %v263 = vshrl.u32 %v262, 7
    %v264 = vsub.s32 0, %v263
    %v265 = vrot.slane %v260, %v264
    %v266 = vlaneseq
    %v267 = vshrl.u32 %v266, 7
    %v268 = vsub.s32 1, %v267
    %v269 = vrot.slane %v260, %v268
    %v288 = vunpack.c.l.b16 %v244
    %v289 = vunpack.c.h.b16 %v244
    %v290 = vunpack.c.l.b16 %v245
    %v291 = vunpack.c.h.b16 %v245
    %v292 = vunpack.c.l.b16 %v246
    %v293 = vunpack.c.h.b16 %v246
    %v294 = vunpack.c.l.b16 %v247
    %v295 = vunpack.c.h.b16 %v247
    %v296 = vunpack.c.l.b16 %v248
    %v297 = vunpack.c.h.b16 %v248
    %v298 = vunpack.c.l.b16 %v249
    %v299 = vunpack.c.h.b16 %v249
    %v300 = vunpack.c.l.b16 %v250
    %v301 = vunpack.c.h.b16 %v250
    %v302 = vunpack.c.l.b16 %v251
    %v303 = vunpack.c.h.b16 %v251
    %v304 = vunpack.c.l.b16 %v252
    %v305 = vunpack.c.h.b16 %v252
    %v306 = vunpack.c.l.b16 %v253
    %v307 = vunpack.c.h.b16 %v253
    %v308 = vunpack.c.l.b16 %v254
    %v309 = vunpack.c.h.b16 %v254
    %v310 = vunpack.c.l.b16 %v255
    %v311 = vunpack.c.h.b16 %v255
    %v312 = vunpack.c.l.b16 %v256
    %v313 = vunpack.c.h.b16 %v256
    %v314 = vunpack.c.l.b16 %v257
    %v315 = vunpack.c.h.b16 %v257
    %v316 = vunpack.c.l.b16 %v258
    %v317 = vunpack.c.h.b16 %v258
    %v318 = vunpack.c.l.b16 %v259
    %v319 = vunpack.c.h.b16 %v259
    %v320 = vpack.c.b16 %v290, %v288
    %v321 = vpack.c.b16 %v291, %v289
    %v322 = vpack.c.b16 %v294, %v292
    %v323 = vpack.c.b16 %v295, %v293
    %v324 = vpack.c.b16 %v298, %v296
    %v325 = vpack.c.b16 %v299, %v297
    %v326 = vpack.c.b16 %v302, %v300
    %v327 = vpack.c.b16 %v303, %v301
    %v328 = vpack.c.b16 %v306, %v304
    %v329 = vpack.c.b16 %v307, %v305
    %v330 = vpack.c.b16 %v310, %v308
    %v331 = vpack.c.b16 %v311, %v309
    %v332 = vpack.c.b16 %v314, %v312
    %v333 = vpack.c.b16 %v315, %v313
    %v334 = vpack.c.b16 %v318, %v316
    %v335 = vpack.c.b16 %v319, %v317
    %352 = vmatprep.subr.bf16.mxu0 %v321
    %353 = vmatpush1.bf16.msra.mxu0 %v320
    %354 = vmatprep.subr.bf16.mxu0 %v323
    %355 = vmatpush1.bf16.msra.mxu0 %v322
    %356 = vmatprep.subr.bf16.mxu0 %v325
    %357 = vmatpush1.bf16.msra.mxu0 %v324
    %358 = vmatprep.subr.bf16.mxu0 %v327
    %359 = vmatpush1.bf16.msra.mxu0 %v326
    %360 = vmatprep.subr.bf16.mxu0 %v329
    %361 = vmatpush1.bf16.msra.mxu0 %v328
    %362 = vmatprep.subr.bf16.mxu0 %v331
    %363 = vmatpush1.bf16.msra.mxu0 %v330
    %364 = vmatprep.subr.bf16.mxu0 %v333
    %365 = vmatpush1.bf16.msra.mxu0 %v332
    %366 = vmatprep.subr.bf16.mxu0 %v335
    %367 = vmatpush1.bf16.msra.mxu0 %v334
    %368 = vmatprep.subr.bf16.mxu0 0
    %369 = vmatpush1.bf16.msra.mxu0 0
    %370 = vmatprep.subr.bf16.mxu0 0
    %371 = vmatpush1.bf16.msra.mxu0 0
    %372 = vmatprep.subr.bf16.mxu0 0
    %373 = vmatpush1.bf16.msra.mxu0 0
    %374 = vmatprep.subr.bf16.mxu0 0
    %375 = vmatpush1.bf16.msra.mxu0 0
    %376 = vmatprep.subr.bf16.mxu0 0
    %377 = vmatpush1.bf16.msra.mxu0 0
    %378 = vmatprep.subr.bf16.mxu0 0
    %379 = vmatpush1.bf16.msra.mxu0 0
    %380 = vmatprep.subr.bf16.mxu0 0
    %381 = vmatpush1.bf16.msra.mxu0 0
    %382 = vmatprep.subr.bf16.mxu0 0
    %383 = vmatpush1.bf16.msra.mxu0 0
    %384 = vmatprep.mubr.bf16.mxu0 0
    %385 = vmatmul.mubr.bf16.gmra.mrb[0].mxu0 %v243
    %v386 = vpop.f32.mrb[0].mxu0
    %v387 = vadd.f32 %v265, %v386
    %v388 = vpop.f32.mrb[0].mxu0
    %v389 = vadd.f32 %v269, %v388
    %v390 = vpop.f32.mrb[0].mxu0
    %v391 = vpop.f32.mrb[0].mxu0
    %392 = vdwg.mxu0
    %v393 = vpack.c.bf16 %v128, %v128
    %v394 = vld [vmem:[#allocation11] sm:$0xf]
    %v395 = vld [vmem:[#allocation11 + $0x4] sm:$0xf]
    %v396 = vld [vmem:[#allocation11 + $0x8] sm:$0xf]
    %v397 = vld [vmem:[#allocation11 + $0xc] sm:$0xf]
    %v398 = vld [vmem:[#allocation11 + $0x10] sm:$0xf]
    %v399 = vld [vmem:[#allocation11 + $0x14] sm:$0xf]
    %v400 = vld [vmem:[#allocation11 + $0x18] sm:$0xf]
    %v401 = vld [vmem:[#allocation11 + $0x1c] sm:$0xf]
    %v402 = vld [vmem:[#allocation11 + $0x20] sm:$0xf]
    %v403 = vld [vmem:[#allocation11 + $0x24] sm:$0xf]
    %v404 = vld [vmem:[#allocation11 + $0x28] sm:$0xf]
    %v405 = vld [vmem:[#allocation11 + $0x2c] sm:$0xf]
    %v406 = vld [vmem:[#allocation11 + $0x30] sm:$0xf]
    %v407 = vld [vmem:[#allocation11 + $0x34] sm:$0xf]
    %v408 = vld [vmem:[#allocation11 + $0x38] sm:$0xf]
    %v409 = vld [vmem:[#allocation11 + $0x3c] sm:$0xf]
    %v426 = vunpack.c.l.b16 %v394
    %v427 = vunpack.c.l.b16 %v395
    %v428 = vunpack.c.l.b16 %v396
    %v429 = vunpack.c.l.b16 %v397
    %v430 = vunpack.c.l.b16 %v398
    %v431 = vunpack.c.l.b16 %v399
    %v432 = vunpack.c.l.b16 %v400
    %v433 = vunpack.c.l.b16 %v401
    %v434 = vunpack.c.l.b16 %v402
    %v435 = vunpack.c.l.b16 %v403
    %v436 = vunpack.c.l.b16 %v404
    %v437 = vunpack.c.l.b16 %v405
    %v438 = vunpack.c.l.b16 %v406
    %v439 = vunpack.c.l.b16 %v407
    %v440 = vunpack.c.l.b16 %v408
    %v441 = vunpack.c.l.b16 %v409
    %v442 = vpack.c.b16 %v427, %v426
    %v443 = vpack.c.b16 %v429, %v428
    %v444 = vpack.c.b16 %v431, %v430
    %v445 = vpack.c.b16 %v433, %v432
    %v446 = vpack.c.b16 %v435, %v434
    %v447 = vpack.c.b16 %v437, %v436
    %v448 = vpack.c.b16 %v439, %v438
    %v449 = vpack.c.b16 %v441, %v440
    %458 = vmatprep.subr.bf16.mxu0 0
    %459 = vmatpush1.bf16.msra.mxu0 %v442
    %460 = vmatprep.subr.bf16.mxu0 0
    %461 = vmatpush1.bf16.msra.mxu0 %v443
    %462 = vmatprep.subr.bf16.mxu0 0
    %463 = vmatpush1.bf16.msra.mxu0 %v444
    %464 = vmatprep.subr.bf16.mxu0 0
    %465 = vmatpush1.bf16.msra.mxu0 %v445
    %466 = vmatprep.subr.bf16.mxu0 0
    %467 = vmatpush1.bf16.msra.mxu0 %v446
    %468 = vmatprep.subr.bf16.mxu0 0
    %469 = vmatpush1.bf16.msra.mxu0 %v447
    %470 = vmatprep.subr.bf16.mxu0 0
    %471 = vmatpush1.bf16.msra.mxu0 %v448
    %472 = vmatprep.subr.bf16.mxu0 0
    %473 = vmatpush1.bf16.msra.mxu0 %v449
    %474 = vmatprep.subr.bf16.mxu0 0
    %475 = vmatpush1.bf16.msra.mxu0 0
    %476 = vmatprep.subr.bf16.mxu0 0
    %477 = vmatpush1.bf16.msra.mxu0 0
    %478 = vmatprep.subr.bf16.mxu0 0
    %479 = vmatpush1.bf16.msra.mxu0 0
    %480 = vmatprep.subr.bf16.mxu0 0
    %481 = vmatpush1.bf16.msra.mxu0 0
    %482 = vmatprep.subr.bf16.mxu0 0
    %483 = vmatpush1.bf16.msra.mxu0 0
    %484 = vmatprep.subr.bf16.mxu0 0
    %485 = vmatpush1.bf16.msra.mxu0 0
    %486 = vmatprep.subr.bf16.mxu0 0
    %487 = vmatpush1.bf16.msra.mxu0 0
    %488 = vmatprep.subr.bf16.mxu0 0
    %489 = vmatpush1.bf16.msra.mxu0 0
    %490 = vmatprep.mubr.bf16.mxu0 0
    %491 = vmatmul.mubr.bf16.gmra.mrb[0].mxu0 %v393
    %v492 = vpop.f32.mrb[0].mxu0
    %v493 = vadd.f32 0.0, %v492
    %v494 = vpop.f32.mrb[0].mxu0
    %v495 = vpop.f32.mrb[0].mxu0
    %v496 = vpop.f32.mrb[0].mxu0
    %497 = vdwg.mxu0
    %v498 = vadd.f32 %v387, %v493
    %v499 = vpack.c.bf16 %v130, %v130
    %v500 = vld [vmem:[#allocation13] sm:$0xf]
    %v501 = vld [vmem:[#allocation13 + $0x4] sm:$0xf]
    %v502 = vld [vmem:[#allocation13 + $0x8] sm:$0xf]
    %v503 = vld [vmem:[#allocation13 + $0xc] sm:$0xf]
    %v504 = vld [vmem:[#allocation13 + $0x10] sm:$0xf]
    %v505 = vld [vmem:[#allocation13 + $0x14] sm:$0xf]
    %v506 = vld [vmem:[#allocation13 + $0x18] sm:$0xf]
    %v507 = vld [vmem:[#allocation13 + $0x1c] sm:$0xf]
    %v508 = vld [vmem:[#allocation13 + $0x20] sm:$0xf]
    %v509 = vld [vmem:[#allocation13 + $0x24] sm:$0xf]
    %v510 = vld [vmem:[#allocation13 + $0x28] sm:$0xf]
    %v511 = vld [vmem:[#allocation13 + $0x2c] sm:$0xf]
    %v512 = vld [vmem:[#allocation13 + $0x30] sm:$0xf]
    %v513 = vld [vmem:[#allocation13 + $0x34] sm:$0xf]
    %v514 = vld [vmem:[#allocation13 + $0x38] sm:$0xf]
    %v515 = vld [vmem:[#allocation13 + $0x3c] sm:$0xf]
    %v532 = vunpack.c.l.b16 %v500
    %v533 = vunpack.c.l.b16 %v501
    %v534 = vunpack.c.l.b16 %v502
    %v535 = vunpack.c.l.b16 %v503
    %v536 = vunpack.c.l.b16 %v504
    %v537 = vunpack.c.l.b16 %v505
    %v538 = vunpack.c.l.b16 %v506
    %v539 = vunpack.c.l.b16 %v507
    %v540 = vunpack.c.l.b16 %v508
    %v541 = vunpack.c.l.b16 %v509
    %v542 = vunpack.c.l.b16 %v510
    %v543 = vunpack.c.l.b16 %v511
    %v544 = vunpack.c.l.b16 %v512
    %v545 = vunpack.c.l.b16 %v513
    %v546 = vunpack.c.l.b16 %v514
    %v547 = vunpack.c.l.b16 %v515
    %v548 = vpack.c.b16 %v533, %v532
    %v549 = vpack.c.b16 %v535, %v534
    %v550 = vpack.c.b16 %v537, %v536
    %v551 = vpack.c.b16 %v539, %v538
    %v552 = vpack.c.b16 %v541, %v540
    %v553 = vpack.c.b16 %v543, %v542
    %v554 = vpack.c.b16 %v545, %v544
    %v555 = vpack.c.b16 %v547, %v546
    %564 = vmatprep.subr.bf16.mxu0 0
    %565 = vmatpush1.bf16.msra.mxu0 %v548
    %566 = vmatprep.subr.bf16.mxu0 0
    %567 = vmatpush1.bf16.msra.mxu0 %v549
    %568 = vmatprep.subr.bf16.mxu0 0
    %569 = vmatpush1.bf16.msra.mxu0 %v550
    %570 = vmatprep.subr.bf16.mxu0 0
    %571 = vmatpush1.bf16.msra.mxu0 %v551
    %572 = vmatprep.subr.bf16.mxu0 0
    %573 = vmatpush1.bf16.msra.mxu0 %v552
    %574 = vmatprep.subr.bf16.mxu0 0
    %575 = vmatpush1.bf16.msra.mxu0 %v553
    %576 = vmatprep.subr.bf16.mxu0 0
    %577 = vmatpush1.bf16.msra.mxu0 %v554
    %578 = vmatprep.subr.bf16.mxu0 0
    %579 = vmatpush1.bf16.msra.mxu0 %v555
    %580 = vmatprep.subr.bf16.mxu0 0
    %581 = vmatpush1.bf16.msra.mxu0 0
    %582 = vmatprep.subr.bf16.mxu0 0
    %583 = vmatpush1.bf16.msra.mxu0 0
    %584 = vmatprep.subr.bf16.mxu0 0
    %585 = vmatpush1.bf16.msra.mxu0 0
    %586 = vmatprep.subr.bf16.mxu0 0
    %587 = vmatpush1.bf16.msra.mxu0 0
    %588 = vmatprep.subr.bf16.mxu0 0
    %589 = vmatpush1.bf16.msra.mxu0 0
    %590 = vmatprep.subr.bf16.mxu0 0
    %591 = vmatpush1.bf16.msra.mxu0 0
    %592 = vmatprep.subr.bf16.mxu0 0
    %593 = vmatpush1.bf16.msra.mxu0 0
    %594 = vmatprep.subr.bf16.mxu0 0
    %595 = vmatpush1.bf16.msra.mxu0 0
    %596 = vmatprep.mubr.bf16.mxu0 0
    %597 = vmatmul.mubr.bf16.gmra.mrb[0].mxu0 %v499
    %v598 = vpop.f32.mrb[0].mxu0
    %v599 = vadd.f32 0.0, %v598
    %v600 = vpop.f32.mrb[0].mxu0
    %v601 = vpop.f32.mrb[0].mxu0
    %v602 = vpop.f32.mrb[0].mxu0
    %603 = vdwg.mxu0
    %v604 = vadd.f32 %v389, %v599
    %v605 = vxor.u32 %v498, 2147483648
    %v606 = vmul.f32 %v605, 1.442695
    %v607 = vpow.pop %v606
    %v608 = vadd.f32 %v607, 1.0
    %v609 = vrcp.pop %v608
    %v610 = vmul.f32 1.0, %v609
    %v611 = vxor.u32 %v604, 2147483648
    %v612 = vmul.f32 %v611, 1.442695
    %v613 = vpow.pop %v612
    %v614 = vadd.f32 %v613, 1.0
    %v615 = vrcp.pop %v614
    %v616 = vmul.f32 1.0, %v615
    %v617 = vmul.f32 %v616, %v130
    %v618 = vsub.f32 1.0, %v616
    %v619 = vmul.f32 %v618, %v129
    %v620 = vadd.f32 %v617, %v619
    %v621 = vmul.f32 %v620, 1.8
    %v622 = vadd.f32 %v621, 0.1
    %v623 = vsub.f32 %v238, %v128
    %v624 = vmul.f32 %v623, %v610
    %v625 = vadd.f32 %v128, %v624
    %v626 = vsub.f32 %v625, %v622
    %vm627 = vcmp.gt.f32.partialorder %v626, 0.0
    %v628 = vsel %vm627, 1, 0
    %v629 = vcvt.s32.f32 %v628
    %v630 = vsub.f32 1.0, %v629
    %v631 = vmul.f32 %v630, %v625
    %632 = vst [vmem:[#allocation14] sm:$0xff] %v631
    %633 = vst [vmem:[#allocation15] sm:$0xff] %v629
    %634 = vst [vmem:[#allocation17] sm:$0xff] %v620
    // Predicated region
    $region70: #{tpu_custom_call.1} parent=1 // pred_check
      _
    $region71: #{tpu_custom_call.1} parent=1 // pred_check_branch
      %636 = sbr.rel (0) target = $region73
    $region72: #{tpu_custom_call.1} parent=1 // pred_region
      %s638 = ssub.s32 128, 128
      %639 = vsyncadd [#allocation4], %s638
      %s641 = sshll.u32 [#allocation14], 4
      %s642 = int_to_ptr.vmem [resolvable:$true] %s641
      %644 = dma.vmem_to_hbm [thread:$0]  %s642, 128, %s10, [#allocation4]
    $region73: #{tpu_custom_call.1} parent=1 // pred_fallthru
      _
    // Predicated region
    $region74: #{tpu_custom_call.1} parent=1 // pred_check
      _
    $region75: #{tpu_custom_call.1} parent=1 // pred_check_branch
      %646 = sbr.rel (0) target = $region77
    $region76: #{tpu_custom_call.1} parent=1 // pred_region
      %s648 = ssub.s32 128, 128
      %649 = vsyncadd [#allocation16], %s648
      %s651 = sshll.u32 [#allocation15], 4
      %s652 = int_to_ptr.vmem [resolvable:$true] %s651
      %654 = dma.vmem_to_hbm [thread:$0]  %s652, 128, %s11, [#allocation16]
    $region77: #{tpu_custom_call.1} parent=1 // pred_fallthru
      _
    // Predicated region
    $region78: #{tpu_custom_call.1} parent=1 // pred_check
      _
    $region79: #{tpu_custom_call.1} parent=1 // pred_check_branch
      %656 = sbr.rel (0) target = $region81
    $region80: #{tpu_custom_call.1} parent=1 // pred_region
      %s658 = ssub.s32 128, 128
      %659 = vsyncadd [#allocation16], %s658
      %s661 = sshll.u32 [#allocation17], 4
      %s662 = int_to_ptr.vmem [resolvable:$true] %s661
      %664 = dma.vmem_to_hbm [thread:$0]  %s662, 128, %s12, [#allocation16]
    $region81: #{tpu_custom_call.1} parent=1 // pred_fallthru
      _
    // Predicated region
    $region82: #{tpu_custom_call.1} parent=1 // pred_check
      _
    $region83: #{tpu_custom_call.1} parent=1 // pred_check_branch
      %666 = sbr.rel (0) target = $region85
    $region84: #{tpu_custom_call.1} parent=1 // pred_region
      %667 = dma.done [#allocation4], 128
    $region85: #{tpu_custom_call.1} parent=1 // pred_fallthru
      _
    // Predicated region
    $region86: #{tpu_custom_call.1} parent=1 // pred_check
      _
    $region87: #{tpu_custom_call.1} parent=1 // pred_check_branch
      %669 = sbr.rel (0) target = $region89
    $region88: #{tpu_custom_call.1} parent=1 // pred_region
      %670 = dma.done [#allocation16], 128
    $region89: #{tpu_custom_call.1} parent=1 // pred_fallthru
      _
    // Predicated region
    $region90: #{tpu_custom_call.1} parent=1 // pred_check
      _
    $region91: #{tpu_custom_call.1} parent=1 // pred_check_branch
      %672 = sbr.rel (0) target = $region93
    $region92: #{tpu_custom_call.1} parent=1 // pred_region
      %673 = dma.done [#allocation16], 128
    $region93: #{tpu_custom_call.1} parent=1 // pred_fallthru
      _
    %674 = vsyncpa [#allocation3], 1
    %675 = vsyncpa [#allocation6], 1
    %676 = vsyncpa [#allocation9], 1
    %677 = vsyncpa [#allocation12], 1
    %678 = vsyncpa [#allocation4], 1
    %679 = vsyncpa [#allocation16], 1

</llo_original>
